<compile_context>
chip_gen: v6e
topology: v6e:2x2x1
jax: 0.10.0
libtpu: 0.0.40
codegen_flags: <defaults>
</compile_context>

<pallas_src>
import jax
import jax.numpy as jnp
from jax import lax
from jax.experimental import pallas as pl
from jax.experimental.pallas import tpu as pltpu


def slice_block_kernel(x_ref, wxfx_ref, bxfx_ref, ws_ref, bs_ref,
                       token_ref, weight_ref, acc_ref, norm_ref):
    n_idx = pl.program_id(1)
    cp = acc_ref.shape[1]

    @pl.when(n_idx == 0)
    def _init():
        acc_ref[...] = jnp.zeros_like(acc_ref)
        norm_ref[...] = jnp.zeros_like(norm_ref)

    x = x_ref[0]                                                        # (TN, C) bf16

    # Fused projections: [x_mid | fx_mid] = x @ [W_x | W_fx] + [b_x + ph | b_fx]
    mid = jnp.dot(x, wxfx_ref[...],
                  preferred_element_type=jnp.float32) + bxfx_ref[...]   # (TN, 2Cp) f32
    x_mid = mid[:, :cp]                                                 # (TN, Cp)
    fx_mid = mid[:, cp:]                                                # (TN, Cp)

    # Logits: temperature already folded into ws/bs; padded cols biased -1e30.
    logits = jnp.dot(x_mid.astype(ws_ref.dtype), ws_ref[...],
                     preferred_element_type=jnp.float32) + bs_ref[...]  # (TN, Mp)

    # Softmax over the slice axis (f32 elementwise math).
    m = jnp.max(logits, axis=-1, keepdims=True)
    e = jnp.exp(logits - m)
    inv = pl.reciprocal(jnp.sum(e, axis=-1, keepdims=True), approx=True)
    sw = e * inv                                                        # (TN, Mp)

    weight_ref[0] = sw.astype(weight_ref.dtype)

    # Accumulate token = sw^T @ fx_mid (bf16 MXU, f32 acc) and norm (f32).
    acc_ref[...] += lax.dot_general(
        sw.astype(jnp.bfloat16), fx_mid.astype(jnp.bfloat16),
        dimension_numbers=(((0,), (0,)), ((), ())),
        preferred_element_type=jnp.float32)                             # (Mp, Cp)
    norm_ref[...] += jnp.sum(sw, axis=0, keepdims=True)                 # (1, Mp)

    @pl.when(n_idx == pl.num_programs(1) - 1)
    def _finalize():
        norm_col = norm_ref[0][:, None]                                 # (Mp, 1)
        inv_norm = pl.reciprocal(norm_col + 1e-5, approx=True)
        token_ref[0] = (acc_ref[...] * inv_norm).astype(token_ref.dtype)


def _round_up(v, m):
    return ((v + m - 1) // m) * m


def slice_block(x, params, *, tn=None):
    """x: (B, N, C) float32. params: dict from init_params. Returns (token, weight)."""
    B, N, C = x.shape
    M = params["ws"].shape[1]
    Cp = _round_up(max(C, 128), 128)
    Mp = _round_up(max(M, 128), 128)

    if tn is None:
        tn = N
        for cand in (512, 256, 128, 64, 32, 16, 8):
            if N % cand == 0:
                tn = cand
                break
    assert N % tn == 0, "N must be divisible by the row tile"

    f32, bf16 = jnp.float32, jnp.bfloat16

    # --- trace-time weight prep (layout plumbing, outside the kernel) ---
    temp = jnp.clip(params["temp"][0], 0.01, 5.0)                       # (M,)
    bx = params["bx"][0] + params["ph"][0]                              # fold placeholder
    bfx = params["bfx"][0]
    ws = params["ws"] / temp[None, :]                                   # fold temperature
    bs = params["bs"][0] / temp

    # Fused, lane-padded x/fx projection: (C, 2*Cp) bf16.
    wx_p = jnp.pad(params["wx"], ((0, 0), (0, Cp - C)))
    wfx_p = jnp.pad(params["wfx"], ((0, 0), (0, Cp - C)))
    w_xfx = jnp.concatenate([wx_p, wfx_p], axis=1).astype(bf16)         # (C, 2Cp)
    b_xfx = jnp.concatenate([jnp.pad(bx, (0, Cp - C)),
                             jnp.pad(bfx, (0, Cp - C))])[None, :]       # (1, 2Cp) f32

    # Slice projection padded to (Cp, Mp); padded logit columns get -1e30 bias
    # so the softmax assigns them zero weight.
    ws_p = jnp.pad(ws, ((0, Cp - C), (0, Mp - M))).astype(bf16)         # (Cp, Mp)
    bs_p = jnp.pad(bs, (0, Mp - M), constant_values=-1e30)[None, :]     # (1, Mp) f32

    x_bf = x.astype(bf16)

    const = lambda shape: pl.BlockSpec(shape, lambda b, n: (0,) * len(shape))

    token_p, weight_p = pl.pallas_call(
        slice_block_kernel,
        out_shape=(
            jax.ShapeDtypeStruct((B, Mp, Cp), f32),   # slice_token (padded)
            jax.ShapeDtypeStruct((B, N, Mp), f32),    # slice_weight (padded)
        ),
        grid_spec=pltpu.PrefetchScalarGridSpec(
            num_scalar_prefetch=0,
            grid=(B, N // tn),
            in_specs=[
                pl.BlockSpec((1, tn, C), lambda b, n: (b, n, 0)),   # x
                const((C, 2 * Cp)),                                 # fused W_x|W_fx
                const((1, 2 * Cp)),                                 # fused biases
                const((Cp, Mp)),                                    # W_slice (scaled)
                const((1, Mp)),                                     # b_slice (scaled)
            ],
            out_specs=[
                pl.BlockSpec((1, Mp, Cp), lambda b, n: (b, 0, 0)),
                pl.BlockSpec((1, tn, Mp), lambda b, n: (b, n, 0)),
            ],
            scratch_shapes=[
                pltpu.VMEM((Mp, Cp), f32),   # token accumulator
                pltpu.VMEM((1, Mp), f32),    # norm accumulator
            ],
        ),
        compiler_params=pltpu.CompilerParams(
            dimension_semantics=("parallel", "arbitrary"),
            vmem_limit_bytes=32 * 1024 * 1024,
        ),
    )(x_bf, w_xfx, b_xfx, ws_p, bs_p)

    # Crop the lane padding added for dense stores.
    return token_p[:, :M, :C], weight_p[:, :, :M]


def init_params(key, emb_dim, slice_num):
    ks = jax.random.split(key, 7)
    scale = 1.0 / jnp.sqrt(emb_dim)
    return {
        # weights stored (in, out): y = x @ W + b  (== PyTorch x @ W_pt.T + b)
        "wx":  jax.random.uniform(ks[0], (emb_dim, emb_dim), jnp.float32,
                                  -scale, scale),
        "bx":  jax.random.uniform(ks[1], (1, emb_dim), jnp.float32,
                                  -scale, scale),
        "wfx": jax.random.uniform(ks[2], (emb_dim, emb_dim), jnp.float32,
                                  -scale, scale),
        "bfx": jax.random.uniform(ks[3], (1, emb_dim), jnp.float32,
                                  -scale, scale),
        "ws":  jax.random.uniform(ks[4], (emb_dim, slice_num), jnp.float32,
                                  -scale, scale),
        "bs":  jax.random.uniform(ks[5], (1, slice_num), jnp.float32,
                                  -scale, scale),
        "ph":  jax.random.uniform(ks[6], (1, emb_dim), jnp.float32) / emb_dim,
        "temp": jnp.full((1, slice_num), 0.5, jnp.float32),
    }


def slice_block_ref(x, p):
    """Pure-JAX f32 reference for correctness checking."""
    fx_mid = x @ p["wfx"] + p["bfx"][0]
    x_mid = x @ p["wx"] + p["bx"][0] + p["ph"][0]
    logits = (x_mid @ p["ws"] + p["bs"][0]) / jnp.clip(p["temp"][0], 0.01, 5.0)
    sw = jax.nn.softmax(logits, axis=-1)
    norm = jnp.sum(sw, axis=-2)[..., None]
    token = jnp.einsum("bnm,bnc->bmc", sw, fx_mid)
    return token / (norm + 1e-5), sw


if __name__ == "__main__":
    B, N, emb_dim, slice_num = 2, 128, 32, 8

    key = jax.random.PRNGKey(0)
    k_x, k_p = jax.random.split(key)
    x = jax.random.normal(k_x, (B, N, emb_dim), jnp.float32)
    params = init_params(k_p, emb_dim, slice_num)

    # tn=64 -> 2 reduction steps per batch element, exercising the accumulator path.
    token, weight = jax.jit(lambda xx, pp: slice_block(xx, pp, tn=64))(x, params)
    jax.block_until_ready((token, weight))

    token_ref, weight_ref = slice_block_ref(x, params)
    assert token.shape == (B, slice_num, emb_dim)
    assert weight.shape == (B, N, slice_num)
    # bf16 GEMM operands + approx reciprocal -> looser tolerance than pure f32.
    assert jnp.allclose(token, token_ref, atol=3e-2, rtol=3e-2), (
        float(jnp.max(jnp.abs(token - token_ref))))
    assert jnp.allclose(weight, weight_ref, atol=3e-2, rtol=3e-2), (
        float(jnp.max(jnp.abs(weight - weight_ref))))

    print("KERNEL_OK")
</pallas_src>

<mosaic_0001>
module attributes {stable_mosaic.version = 11 : i64} {
  func.func @slice_block_kernel(%arg0: i32, %arg1: i32, %arg2: memref<1x64x32xbf16, #tpu.memory_space<vmem>>, %arg3: memref<32x256xbf16, #tpu.memory_space<vmem>>, %arg4: memref<1x256xf32, #tpu.memory_space<vmem>>, %arg5: memref<128x128xbf16, #tpu.memory_space<vmem>>, %arg6: memref<1x128xf32, #tpu.memory_space<vmem>>, %arg7: memref<1x128x128xf32, #tpu.memory_space<vmem>>, %arg8: memref<1x64x128xf32, #tpu.memory_space<vmem>>, %arg9: memref<128x128xf32, #tpu.memory_space<vmem>>, %arg10: memref<1x128xf32, #tpu.memory_space<vmem>>) attributes {dimension_semantics = [#tpu.dimension_semantics<parallel>, #tpu.dimension_semantics<arbitrary>], iteration_bounds = array<i64: 2, 2>, scalar_prefetch = 0 : i64, scratch_operands = 2 : i64, tpu.core_type = #tpu.core_type<tc>, window_params = [{transform_indices = @transform_0, window_bounds = array<i64: 1, 64, 32>}, {pipeline_mode = #tpu.pipeline_mode<synchronous>, transform_indices = @transform_1, window_bounds = array<i64: 32, 256>}, {pipeline_mode = #tpu.pipeline_mode<synchronous>, transform_indices = @transform_2, window_bounds = array<i64: 1, 256>}, {pipeline_mode = #tpu.pipeline_mode<synchronous>, transform_indices = @transform_3, window_bounds = array<i64: 128, 128>}, {pipeline_mode = #tpu.pipeline_mode<synchronous>, transform_indices = @transform_4, window_bounds = array<i64: 1, 128>}, {transform_indices = @transform_5, window_bounds = array<i64: 1, 128, 128>}, {transform_indices = @transform_6, window_bounds = array<i64: 1, 64, 128>}]} {
    %c0_i32 = arith.constant 0 : i32
    %0 = arith.cmpi eq, %arg1, %c0_i32 : i32
    %1 = arith.extui %0 : i1 to i32
    %c0_i32_0 = arith.constant 0 : i32
    %2 = arith.cmpi ne, %1, %c0_i32_0 : i32
    scf.if %2 {
      %cst_28 = arith.constant 0.000000e+00 : f32
      %45 = vector.broadcast %cst_28 : f32 to vector<128x128xf32>
      %c0_29 = arith.constant 0 : index
      %c0_30 = arith.constant 0 : index
      %46 = vector.load %arg9[%c0_29, %c0_30] : memref<128x128xf32, #tpu.memory_space<vmem>>, vector<128x128xf32>
      tpu.vector_store %arg9[%c0_29, %c0_30], %45 {strides = array<i32>} : memref<128x128xf32, #tpu.memory_space<vmem>>, vector<128x128xf32>,
      %cst_31 = arith.constant 0.000000e+00 : f32
      %47 = vector.broadcast %cst_31 : f32 to vector<1x128xf32>
      %c0_32 = arith.constant 0 : index
      %c0_33 = arith.constant 0 : index
      %48 = vector.load %arg10[%c0_32, %c0_33] : memref<1x128xf32, #tpu.memory_space<vmem>>, vector<1x128xf32>
      tpu.vector_store %arg10[%c0_32, %c0_33], %47 {strides = array<i32>} : memref<1x128xf32, #tpu.memory_space<vmem>>, vector<1x128xf32>,
    } else {
    }
    %c0 = arith.constant 0 : index
    %c0_1 = arith.constant 0 : index
    %c0_2 = arith.constant 0 : index
    %3 = vector.load %arg2[%c0, %c0_1, %c0_2] : memref<1x64x32xbf16, #tpu.memory_space<vmem>>, vector<1x64x32xbf16>
    %4 = vector.shape_cast %3 : vector<1x64x32xbf16> to vector<64x32xbf16>
    %c0_3 = arith.constant 0 : index
    %c0_4 = arith.constant 0 : index
    %5 = vector.load %arg3[%c0_3, %c0_4] : memref<32x256xbf16, #tpu.memory_space<vmem>>, vector<32x256xbf16>
    %cst = arith.constant dense<0.000000e+00> : vector<64x256xf32>
    %6 = tpu.matmul %4, %5, %cst {dimension_numbers = #tpu.dot_dimension_numbers<[1], [0], [0], [1], [0, 0, 1, 1], [], []>} : vector<64x32xbf16>, vector<32x256xbf16>, vector<64x256xf32> -> vector<64x256xf32>
    %c0_5 = arith.constant 0 : index
    %c0_6 = arith.constant 0 : index
    %7 = vector.load %arg4[%c0_5, %c0_6] : memref<1x256xf32, #tpu.memory_space<vmem>>, vector<1x256xf32>
    %8 = vector.broadcast %7 : vector<1x256xf32> to vector<64x256xf32>
    %9 = arith.addf %6, %8 : vector<64x256xf32>
    %10 = vector.extract_strided_slice %9 {offsets = [0, 0], sizes = [64, 128], strides = [1, 1]} : vector<64x256xf32> to vector<64x128xf32>
    %11 = vector.extract_strided_slice %9 {offsets = [0, 128], sizes = [64, 128], strides = [1, 1]} : vector<64x256xf32> to vector<64x128xf32>
    %12 = arith.truncf %10 : vector<64x128xf32> to vector<64x128xbf16>
    %c0_7 = arith.constant 0 : index
    %c0_8 = arith.constant 0 : index
    %13 = vector.load %arg5[%c0_7, %c0_8] : memref<128x128xbf16, #tpu.memory_space<vmem>>, vector<128x128xbf16>
    %cst_9 = arith.constant dense<0.000000e+00> : vector<64x128xf32>
    %14 = tpu.matmul %12, %13, %cst_9 {dimension_numbers = #tpu.dot_dimension_numbers<[1], [0], [0], [1], [0, 0, 1, 1], [], []>} : vector<64x128xbf16>, vector<128x128xbf16>, vector<64x128xf32> -> vector<64x128xf32>
    %c0_10 = arith.constant 0 : index
    %c0_11 = arith.constant 0 : index
    %15 = vector.load %arg6[%c0_10, %c0_11] : memref<1x128xf32, #tpu.memory_space<vmem>>, vector<1x128xf32>
    %16 = vector.broadcast %15 : vector<1x128xf32> to vector<64x128xf32>
    %17 = arith.addf %14, %16 : vector<64x128xf32>
    %cst_12 = arith.constant dense<0xFF800000> : vector<64xf32>
    %18 = vector.multi_reduction <maximumf>, %17, %cst_12 [1] : vector<64x128xf32> to vector<64xf32>
    %19 = vector.shape_cast %18 : vector<64xf32> to vector<64x1xf32>
    %20 = vector.broadcast %19 : vector<64x1xf32> to vector<64x128xf32>
    %21 = arith.subf %17, %20 : vector<64x128xf32>
    %22 = math.exp %21 : vector<64x128xf32>
    %cst_13 = arith.constant dense<0.000000e+00> : vector<64xf32>
    %23 = vector.multi_reduction <add>, %22, %cst_13 [1] : vector<64x128xf32> to vector<64xf32>
    %24 = vector.shape_cast %23 : vector<64xf32> to vector<64x1xf32>
    %25 = tpu.reciprocal %24 {approx = true} : vector<64x1xf32> -> vector<64x1xf32>
    %26 = vector.broadcast %25 : vector<64x1xf32> to vector<64x128xf32>
    %27 = arith.mulf %22, %26 : vector<64x128xf32>
    %c0_14 = arith.constant 0 : index
    %c0_15 = arith.constant 0 : index
    %c0_16 = arith.constant 0 : index
    %28 = vector.load %arg8[%c0_14, %c0_15, %c0_16] : memref<1x64x128xf32, #tpu.memory_space<vmem>>, vector<1x64x128xf32>
    %29 = vector.shape_cast %28 : vector<1x64x128xf32> to vector<64x128xf32>
    %30 = vector.shape_cast %27 : vector<64x128xf32> to vector<1x64x128xf32>
    tpu.vector_store %arg8[%c0_14, %c0_15, %c0_16], %30 {strides = array<i32>} : memref<1x64x128xf32, #tpu.memory_space<vmem>>, vector<1x64x128xf32>,
    %c0_17 = arith.constant 0 : index
    %c0_18 = arith.constant 0 : index
    %31 = vector.load %arg9[%c0_17, %c0_18] : memref<128x128xf32, #tpu.memory_space<vmem>>, vector<128x128xf32>
    %32 = arith.truncf %27 : vector<64x128xf32> to vector<64x128xbf16>
    %33 = arith.truncf %11 : vector<64x128xf32> to vector<64x128xbf16>
    %cst_19 = arith.constant dense<0.000000e+00> : vector<128x128xf32>
    %34 = tpu.matmul %32, %33, %cst_19 {dimension_numbers = #tpu.dot_dimension_numbers<[0], [0], [1], [1], [0, 1, 1, 1], [], []>} : vector<64x128xbf16>, vector<64x128xbf16>, vector<128x128xf32> -> vector<128x128xf32>
    %35 = arith.addf %31, %34 : vector<128x128xf32>
    %c0_20 = arith.constant 0 : index
    %c0_21 = arith.constant 0 : index
    %36 = vector.load %arg9[%c0_20, %c0_21] : memref<128x128xf32, #tpu.memory_space<vmem>>, vector<128x128xf32>
    tpu.vector_store %arg9[%c0_20, %c0_21], %35 {strides = array<i32>} : memref<128x128xf32, #tpu.memory_space<vmem>>, vector<128x128xf32>,
    %c0_22 = arith.constant 0 : index
    %c0_23 = arith.constant 0 : index
    %37 = vector.load %arg10[%c0_22, %c0_23] : memref<1x128xf32, #tpu.memory_space<vmem>>, vector<1x128xf32>
    %cst_24 = arith.constant dense<0.000000e+00> : vector<128xf32>
    %38 = vector.multi_reduction <add>, %27, %cst_24 [0] : vector<64x128xf32> to vector<128xf32>
    %39 = vector.shape_cast %38 : vector<128xf32> to vector<1x128xf32>
    %40 = arith.addf %37, %39 : vector<1x128xf32>
    %c0_25 = arith.constant 0 : index
    %c0_26 = arith.constant 0 : index
    %41 = vector.load %arg10[%c0_25, %c0_26] : memref<1x128xf32, #tpu.memory_space<vmem>>, vector<1x128xf32>
    tpu.vector_store %arg10[%c0_25, %c0_26], %40 {strides = array<i32>} : memref<1x128xf32, #tpu.memory_space<vmem>>, vector<1x128xf32>,
    %c1_i32 = arith.constant 1 : i32
    %42 = arith.cmpi eq, %arg1, %c1_i32 : i32
    %43 = arith.extui %42 : i1 to i32
    %c0_i32_27 = arith.constant 0 : i32
    %44 = arith.cmpi ne, %43, %c0_i32_27 : i32
    scf.if %44 {
      %c0_28 = arith.constant 0 : index
      %c0_29 = arith.constant 0 : index
      %45 = vector.load %arg10[%c0_28, %c0_29] : memref<1x128xf32, #tpu.memory_space<vmem>>, vector<1x128xf32>
      %46 = vector.shape_cast %45 : vector<1x128xf32> to vector<128xf32>
      %47 = vector.shape_cast %46 : vector<128xf32> to vector<128x1xf32>
      %cst_30 = arith.constant 9.99999974E-6 : f32
      %48 = vector.broadcast %cst_30 : f32 to vector<128x1xf32>
      %49 = arith.addf %47, %48 : vector<128x1xf32>
      %50 = tpu.reciprocal %49 {approx = true} : vector<128x1xf32> -> vector<128x1xf32>
      %c0_31 = arith.constant 0 : index
      %c0_32 = arith.constant 0 : index
      %51 = vector.load %arg9[%c0_31, %c0_32] : memref<128x128xf32, #tpu.memory_space<vmem>>, vector<128x128xf32>
      %52 = vector.broadcast %50 : vector<128x1xf32> to vector<128x128xf32>
      %53 = arith.mulf %51, %52 : vector<128x128xf32>
      %c0_33 = arith.constant 0 : index
      %c0_34 = arith.constant 0 : index
      %c0_35 = arith.constant 0 : index
      %54 = vector.load %arg7[%c0_33, %c0_34, %c0_35] : memref<1x128x128xf32, #tpu.memory_space<vmem>>, vector<1x128x128xf32>
      %55 = vector.shape_cast %54 : vector<1x128x128xf32> to vector<128x128xf32>
      %56 = vector.shape_cast %53 : vector<128x128xf32> to vector<1x128x128xf32>
      tpu.vector_store %arg7[%c0_33, %c0_34, %c0_35], %56 {strides = array<i32>} : memref<1x128x128xf32, #tpu.memory_space<vmem>>, vector<1x128x128xf32>,
    } else {
    }
    return
  }
  func.func @transform_0(%arg0: i32, %arg1: i32) -> (i32, i32, i32) {
    %c0_i32 = arith.constant 0 : i32
    %c0_i32_0 = arith.constant 0 : i32
    return %arg0, %arg1, %c0_i32 : i32, i32, i32
  }
  func.func @transform_1(%arg0: i32, %arg1: i32) -> (i32, i32) {
    %c0_i32 = arith.constant 0 : i32
    %c0_i32_0 = arith.constant 0 : i32
    %c0_i32_1 = arith.constant 0 : i32
    return %c0_i32, %c0_i32_0 : i32, i32
  }
  func.func @transform_2(%arg0: i32, %arg1: i32) -> (i32, i32) {
    %c0_i32 = arith.constant 0 : i32
    %c0_i32_0 = arith.constant 0 : i32
    %c0_i32_1 = arith.constant 0 : i32
    return %c0_i32, %c0_i32_0 : i32, i32
  }
  func.func @transform_3(%arg0: i32, %arg1: i32) -> (i32, i32) {
    %c0_i32 = arith.constant 0 : i32
    %c0_i32_0 = arith.constant 0 : i32
    %c0_i32_1 = arith.constant 0 : i32
    return %c0_i32, %c0_i32_0 : i32, i32
  }
  func.func @transform_4(%arg0: i32, %arg1: i32) -> (i32, i32) {
    %c0_i32 = arith.constant 0 : i32
    %c0_i32_0 = arith.constant 0 : i32
    %c0_i32_1 = arith.constant 0 : i32
    return %c0_i32, %c0_i32_0 : i32, i32
  }
  func.func @transform_5(%arg0: i32, %arg1: i32) -> (i32, i32, i32) {
    %c0_i32 = arith.constant 0 : i32
    %c0_i32_0 = arith.constant 0 : i32
    %c0_i32_1 = arith.constant 0 : i32
    return %arg0, %c0_i32, %c0_i32_0 : i32, i32, i32
  }
  func.func @transform_6(%arg0: i32, %arg1: i32) -> (i32, i32, i32) {
    %c0_i32 = arith.constant 0 : i32
    %c0_i32_0 = arith.constant 0 : i32
    return %arg0, %arg1, %c0_i32 : i32, i32, i32
  }
}

</mosaic_0001>

<llo_original>
// kernel: _lambda_.1
$region0: #{_lambda_.1}
  #allocation0 [shape = 'u32[]', space=smem, size = 0x4, offset = 0x4, fixed_abs, tag = 'smem constant byte address 0x4 - core index']
  #allocation1 [shape = 'u32[144,128]{1,0:T(1,128)}', space=vmem, size = 0x12000, scoped, tag = 'internal scratch']
  #allocation2 [shape = 'f32[128,128]{1,0:T(8,128)}', space=vmem, size = 0x10000, scoped, tag = 'scratch operand']
  #allocation3 [shape = 'f32[1,128]{1,0:T(1,128)}', space=vmem, size = 0x200, scoped, tag = 'scratch operand']
  %s0 = inlined_call_operand.vmem [shape: bf16[2,128,32], index: 0, kind: input, shape index: {}]
  %s1 = inlined_call_operand.vmem [shape: bf16[32,256], index: 1, kind: input, shape index: {}]
  %s2 = inlined_call_operand.vmem [shape: f32[1,256], index: 2, kind: input, shape index: {}]
  %s3 = inlined_call_operand.vmem [shape: bf16[128,128], index: 3, kind: input, shape index: {}]
  %s4 = inlined_call_operand.vmem [shape: f32[1,128], index: 4, kind: input, shape index: {}]
  %s5 = inlined_call_operand.vmem [shape: f32[2,128,128], index: 5, kind: output, shape index: {0}]
  %s6 = inlined_call_operand.vmem [shape: f32[2,128,128], index: 6, kind: output, shape index: {1}]
  %7 = xla_tuple %s5, %s6
  %s8 = sld [smem:[#allocation0]]
  $region69: #{_lambda_.1} parent=0
    _
  %s10 = ssub.s32 1, %s8
  %s11 = scalar_select 0, %s10, %s8
  loop: start=0, step=1, limit=6
  $region2: #{_lambda_.1} parent=0 // loop_pre_header
    _
  $region3: #{_lambda_.1} parent=0 // loop_header
    %s13 = sphi 0, %s17
    %p14 = scmp.ge.s32.totalorder %s13, 6
    %s20 = sphi 0, %s32
    %s21 = sphi 0, %s28
    %s22 = sphi 0, %s20
    %s23 = sphi 0, %s21
    %s24 = sphi 0, %s22
    %s25 = sphi 0, %s23
    %s37 = sphi 0, %s39
    %s40 = sphi 0, %s37
    %s41 = sphi 0, %s40
    %s57 = sphi 0, %s41
    %s61 = sphi 0, %s61
    %s63 = sphi 0, %s61
    %s64 = sphi 0, %s63
    %s78 = sphi 0, %s64
    %s82 = sphi 0, %s82
    %s84 = sphi 0, %s82
    %s85 = sphi 0, %s84
    %s99 = sphi 0, %s85
    %s103 = sphi 0, %s103
    %s105 = sphi 0, %s103
    %s106 = sphi 0, %s105
    %s120 = sphi 0, %s106
    %s124 = sphi 0, %s124
    %s126 = sphi 0, %s124
    %s127 = sphi 0, %s126
    %s141 = sphi 0, %s127
    %s147 = sphi 0, %s149
    %s150 = sphi 0, %s147
    %s151 = sphi 0, %s150
    %s167 = sphi 0, %s151
    %s175 = sphi 0, %s177
    %s178 = sphi 0, %s175
    %s179 = sphi 0, %s178
    %s195 = sphi 0, %s179
  $region4: #{_lambda_.1} parent=0 // loop_header_branch
    %16 = sbr.rel (%p14) target = $region8
  $region5: #{_lambda_.1} parent=0 // loop_body
    %s18 = ssub.s32 %s13, 1
    %s19 = ssub.s32 %s13, 2
    %s26 = sadd.s32 1, %s21
    %p27 = scmp.ge.s32.totalorder %s26, 2
    %s28 = scalar_select %p27, 0, %s26
    %s29 = sadd.s32 1, %s20
    %s30 = scalar_select %p27, %s29, %s20
    %p31 = scmp.ge.s32.totalorder %s30, 2
    %s32 = scalar_select %p31, 0, %s30
    %s33 = ssub.s32 %s20, %s32
    %s34 = ssub.s32 %s21, %s28
    %s35 = sor.u32 %s33, %s34
    %p36 = scmp.eq.s32.totalorder %s35, 0
    %s38 = sadd.s32 %s37, 1
    %s39 = scalar_select %p36, %s37, %s38
    %p42 = pneg %p36
    %p43 = scmp.eq.s32.totalorder %s13, 3
    %p44 = por %p42, %p43
    %p45 = scmp.ne.s32.totalorder %s37, %s40
    %p46 = scmp.eq.s32.totalorder %s13, 0
    %p47 = por %p45, %p46
    %p48 = scmp.ne.s32.totalorder %s37, %s40
    %p49 = scmp.eq.s32.totalorder %s18, 3
    %p50 = por %p48, %p49
    %p51 = scmp.ne.s32.totalorder %s40, %s41
    %p52 = scmp.eq.s32.totalorder %s18, 0
    %p53 = por %p51, %p52
    %p54 = scmp.ne.s32.totalorder %s40, %s41
    %p55 = scmp.eq.s32.totalorder %s19, 3
    %p56 = por %p54, %p55
    %p58 = scmp.ne.s32.totalorder %s41, %s57
    %p59 = scmp.eq.s32.totalorder %s19, 0
    %p60 = por %p58, %p59
    %s62 = sadd.s32 %s61, 1
    %p65 = scmp.eq.s32.totalorder %s13, 3
    %p66 = scmp.ne.s32.totalorder %s61, %s63
    %p67 = scmp.eq.s32.totalorder %s13, 0
    %p68 = por %p66, %p67
    %p69 = scmp.ne.s32.totalorder %s61, %s63
    %p70 = scmp.eq.s32.totalorder %s18, 3
    %p71 = por %p69, %p70
    %p72 = scmp.ne.s32.totalorder %s63, %s64
    %p73 = scmp.eq.s32.totalorder %s18, 0
    %p74 = por %p72, %p73
    %p75 = scmp.ne.s32.totalorder %s63, %s64
    %p76 = scmp.eq.s32.totalorder %s19, 3
    %p77 = por %p75, %p76
    %p79 = scmp.ne.s32.totalorder %s64, %s78
    %p80 = scmp.eq.s32.totalorder %s19, 0
    %p81 = por %p79, %p80
    %s83 = sadd.s32 %s82, 1
    %p86 = scmp.eq.s32.totalorder %s13, 3
    %p87 = scmp.ne.s32.totalorder %s82, %s84
    %p88 = scmp.eq.s32.totalorder %s13, 0
    %p89 = por %p87, %p88
    %p90 = scmp.ne.s32.totalorder %s82, %s84
    %p91 = scmp.eq.s32.totalorder %s18, 3
    %p92 = por %p90, %p91
    %p93 = scmp.ne.s32.totalorder %s84, %s85
    %p94 = scmp.eq.s32.totalorder %s18, 0
    %p95 = por %p93, %p94
    %p96 = scmp.ne.s32.totalorder %s84, %s85
    %p97 = scmp.eq.s32.totalorder %s19, 3
    %p98 = por %p96, %p97
    %p100 = scmp.ne.s32.totalorder %s85, %s99
    %p101 = scmp.eq.s32.totalorder %s19, 0
    %p102 = por %p100, %p101
    %s104 = sadd.s32 %s103, 1
    %p107 = scmp.eq.s32.totalorder %s13, 3
    %p108 = scmp.ne.s32.totalorder %s103, %s105
    %p109 = scmp.eq.s32.totalorder %s13, 0
    %p110 = por %p108, %p109
    %p111 = scmp.ne.s32.totalorder %s103, %s105
    %p112 = scmp.eq.s32.totalorder %s18, 3
    %p113 = por %p111, %p112
    %p114 = scmp.ne.s32.totalorder %s105, %s106
    %p115 = scmp.eq.s32.totalorder %s18, 0
    %p116 = por %p114, %p115
    %p117 = scmp.ne.s32.totalorder %s105, %s106
    %p118 = scmp.eq.s32.totalorder %s19, 3
    %p119 = por %p117, %p118
    %p121 = scmp.ne.s32.totalorder %s106, %s120
    %p122 = scmp.eq.s32.totalorder %s19, 0
    %p123 = por %p121, %p122
    %s125 = sadd.s32 %s124, 1
    %p128 = scmp.eq.s32.totalorder %s13, 3
    %p129 = scmp.ne.s32.totalorder %s124, %s126
    %p130 = scmp.eq.s32.totalorder %s13, 0
    %p131 = por %p129, %p130
    %p132 = scmp.ne.s32.totalorder %s124, %s126
    %p133 = scmp.eq.s32.totalorder %s18, 3
    %p134 = por %p132, %p133
    %p135 = scmp.ne.s32.totalorder %s126, %s127
    %p136 = scmp.eq.s32.totalorder %s18, 0
    %p137 = por %p135, %p136
    %p138 = scmp.ne.s32.totalorder %s126, %s127
    %p139 = scmp.eq.s32.totalorder %s19, 3
    %p140 = por %p138, %p139
    %p142 = scmp.ne.s32.totalorder %s127, %s141
    %p143 = scmp.eq.s32.totalorder %s19, 0
    %p144 = por %p142, %p143
    %s145 = ssub.s32 %s20, %s32
    %p146 = scmp.eq.s32.totalorder %s145, 0
    %s148 = sadd.s32 %s147, 1
    %s149 = scalar_select %p146, %s147, %s148
    %p152 = pneg %p146
    %p153 = scmp.eq.s32.totalorder %s13, 3
    %p154 = por %p152, %p153
    %p155 = scmp.ne.s32.totalorder %s147, %s150
    %p156 = scmp.eq.s32.totalorder %s13, 0
    %p157 = por %p155, %p156
    %p158 = scmp.ne.s32.totalorder %s147, %s150
    %p159 = scmp.eq.s32.totalorder %s18, 3
    %p160 = por %p158, %p159
    %p161 = scmp.ne.s32.totalorder %s150, %s151
    %p162 = scmp.eq.s32.totalorder %s18, 0
    %p163 = por %p161, %p162
    %p164 = scmp.ne.s32.totalorder %s150, %s151
    %p165 = scmp.eq.s32.totalorder %s19, 3
    %p166 = por %p164, %p165
    %p168 = scmp.ne.s32.totalorder %s151, %s167
    %p169 = scmp.eq.s32.totalorder %s19, 0
    %p170 = por %p168, %p169
    %s171 = ssub.s32 %s20, %s32
    %s172 = ssub.s32 %s21, %s28
    %s173 = sor.u32 %s171, %s172
    %p174 = scmp.eq.s32.totalorder %s173, 0
    %s176 = sadd.s32 %s175, 1
    %s177 = scalar_select %p174, %s175, %s176
    %p180 = pneg %p174
    %p181 = scmp.eq.s32.totalorder %s13, 3
    %p182 = por %p180, %p181
    %p183 = scmp.ne.s32.totalorder %s175, %s178
    %p184 = scmp.eq.s32.totalorder %s13, 0
    %p185 = por %p183, %p184
    %p186 = scmp.ne.s32.totalorder %s175, %s178
    %p187 = scmp.eq.s32.totalorder %s18, 3
    %p188 = por %p186, %p187
    %p189 = scmp.ne.s32.totalorder %s178, %s179
    %p190 = scmp.eq.s32.totalorder %s18, 0
    %p191 = por %p189, %p190
    %p192 = scmp.ne.s32.totalorder %s178, %s179
    %p193 = scmp.eq.s32.totalorder %s19, 3
    %p194 = por %p192, %p193
    %p196 = scmp.ne.s32.totalorder %s179, %s195
    %p197 = scmp.eq.s32.totalorder %s19, 0
    %p198 = por %p196, %p197
    %p199 = scmp.le.s32.totalorder 1, %s13
    %p200 = scmp.lt.s32.totalorder %s13, 5
    %p201 = pnand %p199, %p200
    %p202 = pneg %p201
    // Predicated region
    $region9: #{_lambda_.1} parent=5 // pred_check
      _
    $region10: #{_lambda_.1} parent=5 // pred_check_branch
      %204 = sbr.rel (%p201) target = $region12
    $region11: #{_lambda_.1} parent=5 // pred_region
      %s205 = ssub.s32 %s13, 1
      // Predicated region
      $region13: #{_lambda_.1} parent=11 // pred_check
        %p206 = pneg %p74
      $region14: #{_lambda_.1} parent=11 // pred_check_branch
        %208 = sbr.rel (%p206) target = $region16
      $region15: #{_lambda_.1} parent=11 // pred_region
        _
      $region16: #{_lambda_.1} parent=11 // pred_fallthru
        _
      // Predicated region
      $region17: #{_lambda_.1} parent=11 // pred_check
        %p209 = pneg %p95
      $region18: #{_lambda_.1} parent=11 // pred_check_branch
        %211 = sbr.rel (%p209) target = $region20
      $region19: #{_lambda_.1} parent=11 // pred_region
        _
      $region20: #{_lambda_.1} parent=11 // pred_fallthru
        _
      // Predicated region
      $region21: #{_lambda_.1} parent=11 // pred_check
        %p212 = pneg %p116
      $region22: #{_lambda_.1} parent=11 // pred_check_branch
        %214 = sbr.rel (%p212) target = $region24
      $region23: #{_lambda_.1} parent=11 // pred_region
        _
      $region24: #{_lambda_.1} parent=11 // pred_fallthru
        _
      // Predicated region
      $region25: #{_lambda_.1} parent=11 // pred_check
        %p215 = pneg %p137
      $region26: #{_lambda_.1} parent=11 // pred_check_branch
        %217 = sbr.rel (%p215) target = $region28
      $region27: #{_lambda_.1} parent=11 // pred_region
        _
      $region28: #{_lambda_.1} parent=11 // pred_fallthru
        _
    $region12: #{_lambda_.1} parent=5 // pred_fallthru
      _
    %p218 = scmp.lt.s32.totalorder %s13, 4
    // Predicated region
    $region29: #{_lambda_.1} parent=5 // pred_check
      %p219 = pneg %p218
    $region30: #{_lambda_.1} parent=5 // pred_check_branch
      %221 = sbr.rel (%p219) target = $region32
    $region31: #{_lambda_.1} parent=5 // pred_region
      // Predicated region
      $region33: #{_lambda_.1} parent=31 // pred_check
        %p222 = pneg %p47
      $region34: #{_lambda_.1} parent=31 // pred_check_branch
        %224 = sbr.rel (%p222) target = $region36
      $region35: #{_lambda_.1} parent=31 // pred_region
        %s225 = smul.u32 8, %s21
        %p226 = scmp.lt.s32.totalorder %s20, 1
        %s227 = scalar_select %p226, %s20, 1
        %p228 = scmp.lt.s32.totalorder %s225, 15
        %s229 = scalar_select %p228, %s225, 15
        %s230 = smul.addr %s227, 16
        %s231 = sadd.s32 %s229, %s230
        %s232 = smul.addr %s231, 4
        %s233 = scalar_lea.vmem %s0, %s232
        %s234 = smul.u32 8, %s21
      $region36: #{_lambda_.1} parent=31 // pred_fallthru
        _
    $region32: #{_lambda_.1} parent=5 // pred_fallthru
      _
    %p235 = scmp.le.s32.totalorder 1, %s13
    %p236 = scmp.lt.s32.totalorder %s13, 5
    %p237 = pnand %p235, %p236
    %p238 = pneg %p237
    // Predicated region
    $region37: #{_lambda_.1} parent=5 // pred_check
      _
    $region38: #{_lambda_.1} parent=5 // pred_check_branch
      %240 = sbr.rel (%p237) target = $region40
    $region39: #{_lambda_.1} parent=5 // pred_region
      %s241 = ssub.s32 %s13, 1
      %s242 = smul.u32 8, %s23
      %p243 = scmp.lt.s32.totalorder %s22, 1
      %s244 = scalar_select %p243, %s22, 1
      %p245 = scmp.lt.s32.totalorder %s242, 15
      %s246 = scalar_select %p245, %s242, 15
      %s247 = smul.addr %s244, 16
      %s248 = sadd.s32 %s246, %s247
      %s249 = smul.addr %s248, 4
      %s250 = scalar_lea.vmem %s0, %s249
      %p251 = pneg %p53
      %p252 = pneg %p50
      %p253 = pneg %p74
      %p254 = pneg %p71
      %p255 = pneg %p95
      %p256 = pneg %p92
      %p257 = pneg %p116
      %p258 = pneg %p113
      %p259 = pneg %p137
      %p260 = pneg %p134
      %p261 = pneg %p163
      %p262 = pneg %p160
      %p263 = scmp.lt.s32.totalorder %s22, 1
      %s264 = scalar_select %p263, %s22, 1
      %s265 = smul.addr %s264, 16
      %s266 = smul.addr %s265, 8
      %s267 = scalar_lea.vmem %s5, %s266
      %p268 = pneg %p191
      %p269 = pneg %p188
      %s270 = smul.u32 8, %s23
      %p271 = scmp.lt.s32.totalorder %s22, 1
      %s272 = scalar_select %p271, %s22, 1
      %p273 = scmp.lt.s32.totalorder %s270, 15
      %s274 = scalar_select %p273, %s270, 15
      %s275 = smul.addr %s272, 16
      %s276 = sadd.s32 %s274, %s275
      %s277 = smul.addr %s276, 8
      %s278 = scalar_lea.vmem %s6, %s277
      %s279 = smul.u32 8, %s23
      %p280 = scmp.lt.s32.totalorder %s22, 1
      %s281 = scalar_select %p280, %s22, 1
      %p282 = scmp.lt.s32.totalorder %s279, 15
      %s283 = scalar_select %p282, %s279, 15
      %s284 = smul.addr %s281, 16
      %s285 = sadd.s32 %s283, %s284
      %s286 = smul.addr %s285, 4
      %s287 = scalar_lea.vmem %s0, %s286
      %s288 = smul.u32 8, %s23
      %p289 = scmp.lt.s32.totalorder %s22, 1
      %s290 = scalar_select %p289, %s22, 1
      %s291 = smul.addr %s290, 16
      %s292 = smul.addr %s291, 8
      %s293 = scalar_lea.vmem %s5, %s292
      %s294 = smul.u32 8, %s23
      %p295 = scmp.lt.s32.totalorder %s22, 1
      %s296 = scalar_select %p295, %s22, 1
      %p297 = scmp.lt.s32.totalorder %s294, 15
      %s298 = scalar_select %p297, %s294, 15
      %s299 = smul.addr %s296, 16
      %s300 = sadd.s32 %s298, %s299
      %s301 = smul.addr %s300, 8
      %s302 = scalar_lea.vmem %s6, %s301
      %s303 = smul.u32 8, %s23
      %p305 = scmp.eq.s32.totalorder %s23, 0
      // Predicated region
      $region41: #{_lambda_.1} parent=39 // pred_check
        %p306 = pneg %p305
      $region42: #{_lambda_.1} parent=39 // pred_check_branch
        %308 = sbr.rel (%p306) target = $region44
      $region43: #{_lambda_.1} parent=39 // pred_region
        %309 = vst [vmem:[#allocation2] sm:$0xff] 0.0
        %310 = vst [vmem:[#allocation2 + $0x8] sm:$0xff] 0.0
        %311 = vst [vmem:[#allocation2 + $0x10] sm:$0xff] 0.0
        %312 = vst [vmem:[#allocation2 + $0x18] sm:$0xff] 0.0
        %313 = vst [vmem:[#allocation2 + $0x20] sm:$0xff] 0.0
        %314 = vst [vmem:[#allocation2 + $0x28] sm:$0xff] 0.0
        %315 = vst [vmem:[#allocation2 + $0x30] sm:$0xff] 0.0
        %316 = vst [vmem:[#allocation2 + $0x38] sm:$0xff] 0.0
        %317 = vst [vmem:[#allocation2 + $0x40] sm:$0xff] 0.0
        %318 = vst [vmem:[#allocation2 + $0x48] sm:$0xff] 0.0
        %319 = vst [vmem:[#allocation2 + $0x50] sm:$0xff] 0.0
        %320 = vst [vmem:[#allocation2 + $0x58] sm:$0xff] 0.0
        %321 = vst [vmem:[#allocation2 + $0x60] sm:$0xff] 0.0
        %322 = vst [vmem:[#allocation2 + $0x68] sm:$0xff] 0.0
        %323 = vst [vmem:[#allocation2 + $0x70] sm:$0xff] 0.0
        %324 = vst [vmem:[#allocation2 + $0x78] sm:$0xff] 0.0
        %325 = vst [vmem:[#allocation3] sm:$0x1] 0.0
      $region44: #{_lambda_.1} parent=39 // pred_fallthru
        _
      %v326 = vld [vmem:[%s287] sm:$0xf]
      %v327 = vld [vmem:[%s287 + $0x4] sm:$0xf]
      %v328 = vld [vmem:[%s287 + $0x8] sm:$0xf]
      %v329 = vld [vmem:[%s287 + $0xc] sm:$0xf]
      %v330 = vld [vmem:[%s287 + $0x10] sm:$0xf]
      %v331 = vld [vmem:[%s287 + $0x14] sm:$0xf]
      %v332 = vld [vmem:[%s287 + $0x18] sm:$0xf]
      %v333 = vld [vmem:[%s287 + $0x1c] sm:$0xf]
      %v334 = vld [vmem:[%s1] sm:$0xff]
      %v335 = vld [vmem:[%s1 + $0x8] sm:$0xff]
      %v336 = vld [vmem:[%s1 + $0x10] sm:$0xff]
      %v337 = vld [vmem:[%s1 + $0x18] sm:$0xff]
      %v338 = vld [vmem:[%s2] sm:$0x3]
      %v340 = vlaneseq
      %v341 = vshrl.u32 %v340, 7
      %v342 = vsub.s32 0, %v341
      %v343 = vrot.slane %v338, %v342
      %v344 = vlaneseq
      %v345 = vshrl.u32 %v344, 7
      %v346 = vsub.s32 1, %v345
      %v347 = vrot.slane %v338, %v346
      %v358 = vunpack.c.l.b16 %v326
      %v359 = vunpack.c.l.b16 %v327
      %v360 = vunpack.c.l.b16 %v328
      %v361 = vunpack.c.l.b16 %v329
      %v362 = vunpack.c.l.b16 %v330
      %v363 = vunpack.c.l.b16 %v331
      %v364 = vunpack.c.l.b16 %v332
      %v365 = vunpack.c.l.b16 %v333
      %v366 = vpack.c.b16 %v359, %v358
      %v367 = vpack.c.b16 %v361, %v360
      %v368 = vpack.c.b16 %v363, %v362
      %v369 = vpack.c.b16 %v365, %v364
      %v374 = vunpack.c.l.b16 %v334
      %v375 = vunpack.c.h.b16 %v334
      %v376 = vunpack.c.l.b16 %v335
      %v377 = vunpack.c.h.b16 %v335
      %v378 = vunpack.c.l.b16 %v336
      %v379 = vunpack.c.h.b16 %v336
      %v380 = vunpack.c.l.b16 %v337
      %v381 = vunpack.c.h.b16 %v337
      %v382 = vpack.c.b16 %v376, %v374
      %v383 = vpack.c.b16 %v377, %v375
      %v384 = vpack.c.b16 %v380, %v378
      %v385 = vpack.c.b16 %v381, %v379
      %vm390 = vcmask 261120
      %v392 = vsel %vm390, %v366, 0
      %v395 = vsel %vm390, %v367, 0
      %v398 = vsel %vm390, %v368, 0
      %v401 = vsel %vm390, %v369, 0
      %403 = vmatprep.subr.bf16.mxu0 0
      %404 = vmatpush1.bf16.msra.mxu0 0
      %405 = vmatprep.subr.bf16.mxu0 0
      %406 = vmatpush1.bf16.msra.mxu0 0
      %407 = vmatprep.subr.bf16.mxu0 0
      %408 = vmatpush1.bf16.msra.mxu0 0
      %409 = vmatprep.subr.bf16.mxu0 0
      %410 = vmatpush1.bf16.msra.mxu0 0
      %411 = vmatprep.subr.bf16.mxu0 0
      %412 = vmatpush1.bf16.msra.mxu0 0
      %413 = vmatprep.subr.bf16.mxu0 0
      %414 = vmatpush1.bf16.msra.mxu0 0
      %415 = vmatprep.subr.bf16.mxu0 %v385
      %416 = vmatpush1.bf16.msra.mxu0 %v384
      %417 = vmatprep.subr.bf16.mxu0 %v383
      %418 = vmatpush1.bf16.msra.mxu0 %v382
      %419 = vmatprep.subr.bf16.mxu0 0
      %420 = vmatpush2.bf16.msra.mxu0 0
      %421 = vmatprep.subr.bf16.mxu0 0
      %422 = vmatpush2.bf16.msra.mxu0 0
      %423 = vmatprep.subr.bf16.mxu0 0
      %424 = vmatpush2.bf16.msra.mxu0 0
      %425 = vmatprep.subr.bf16.mxu0 0
      %426 = vmatpush2.bf16.msra.mxu0 0
      %427 = vmatprep.subr.bf16.mxu0 0
      %428 = vmatpush2.bf16.msra.mxu0 0
      %429 = vmatprep.subr.bf16.mxu0 0
      %430 = vmatpush2.bf16.msra.mxu0 0
      %431 = vmatprep.subr.bf16.mxu0 0
      %432 = vmatpush2.bf16.msra.mxu0 0
      %433 = vmatprep.subr.bf16.mxu0 0
      %434 = vmatpush2.bf16.msra.mxu0 0
      %435 = vmatprep.mubr.bf16.mxu0 0
      %436 = vmatmul.mubr.bf16.gmra.mxu0 %v392
      %v437 = vpop.f32.mrf.mxu0
      %v438 = vadd.f32 %v343, %v437
      %v439 = vpop.f32.mrf.mxu0
      %v440 = vadd.f32 %v347, %v439
      %v441 = vpop.f32.mrf.mxu0
      %v442 = vadd.f32 %v343, %v441
      %v443 = vpop.f32.mrf.mxu0
      %v444 = vadd.f32 %v347, %v443
      %445 = vmatprep.mubr.bf16.mxu0 0
      %446 = vmatmul.mubr.bf16.gmra.mxu0 %v395
      %v447 = vpop.f32.mrf.mxu0
      %v448 = vadd.f32 %v343, %v447
      %v449 = vpop.f32.mrf.mxu0
      %v450 = vadd.f32 %v347, %v449
      %v451 = vpop.f32.mrf.mxu0
      %v452 = vadd.f32 %v343, %v451
      %v453 = vpop.f32.mrf.mxu0
      %v454 = vadd.f32 %v347, %v453
      %455 = vmatprep.mubr.bf16.mxu0 0
      %456 = vmatmul.mubr.bf16.gmra.mxu0 %v398
      %v457 = vpop.f32.mrf.mxu0
      %v458 = vadd.f32 %v343, %v457
      %v459 = vpop.f32.mrf.mxu0
      %v460 = vadd.f32 %v347, %v459
      %v461 = vpop.f32.mrf.mxu0
      %v462 = vadd.f32 %v343, %v461
      %v463 = vpop.f32.mrf.mxu0
      %v464 = vadd.f32 %v347, %v463
      %465 = vmatprep.mubr.bf16.mxu0 0
      %466 = vmatmul.mubr.bf16.gmra.mxu0 %v401
      %v467 = vpop.f32.mrf.mxu0
      %v468 = vadd.f32 %v343, %v467
      %v469 = vpop.f32.mrf.mxu0
      %v470 = vadd.f32 %v347, %v469
      %v471 = vpop.f32.mrf.mxu0
      %v472 = vadd.f32 %v343, %v471
      %v473 = vpop.f32.mrf.mxu0
      %v474 = vadd.f32 %v347, %v473
      %475 = vdwg.mxu0
      %v476 = vpack.c.bf16 %v442, %v438
      %v477 = vpack.c.bf16 %v452, %v448
      %v478 = vpack.c.bf16 %v462, %v458
      %v479 = vpack.c.bf16 %v472, %v468
      %v480 = vld [vmem:[%s3] sm:$0xf]
      %v481 = vld [vmem:[%s3 + $0x4] sm:$0xf]
      %v482 = vld [vmem:[%s3 + $0x8] sm:$0xf]
      %v483 = vld [vmem:[%s3 + $0xc] sm:$0xf]
      %v484 = vld [vmem:[%s3 + $0x10] sm:$0xf]
      %v485 = vld [vmem:[%s3 + $0x14] sm:$0xf]
      %v486 = vld [vmem:[%s3 + $0x18] sm:$0xf]
      %v487 = vld [vmem:[%s3 + $0x1c] sm:$0xf]
      %v488 = vld [vmem:[%s3 + $0x20] sm:$0xf]
      %v489 = vld [vmem:[%s3 + $0x24] sm:$0xf]
      %v490 = vld [vmem:[%s3 + $0x28] sm:$0xf]
      %v491 = vld [vmem:[%s3 + $0x2c] sm:$0xf]
      %v492 = vld [vmem:[%s3 + $0x30] sm:$0xf]
      %v493 = vld [vmem:[%s3 + $0x34] sm:$0xf]
      %v494 = vld [vmem:[%s3 + $0x38] sm:$0xf]
      %v495 = vld [vmem:[%s3 + $0x3c] sm:$0xf]
      %v496 = vld [vmem:[%s4] sm:$0x1]
      %v498 = vlaneseq
      %v499 = vshrl.u32 %v498, 7
      %v500 = vsub.s32 0, %v499
      %v501 = vrot.slane %v496, %v500
      %v519 = vunpack.c.l.b16 %v480
      %v520 = vunpack.c.l.b16 %v481
      %v521 = vunpack.c.l.b16 %v482
      %v522 = vunpack.c.l.b16 %v483
      %v523 = vunpack.c.l.b16 %v484
      %v524 = vunpack.c.l.b16 %v485
      %v525 = vunpack.c.l.b16 %v486
      %v526 = vunpack.c.l.b16 %v487
      %v527 = vunpack.c.l.b16 %v488
      %v528 = vunpack.c.l.b16 %v489
      %v529 = vunpack.c.l.b16 %v490
      %v530 = vunpack.c.l.b16 %v491
      %v531 = vunpack.c.l.b16 %v492
      %v532 = vunpack.c.l.b16 %v493
      %v533 = vunpack.c.l.b16 %v494
      %v534 = vunpack.c.l.b16 %v495
      %v535 = vpack.c.b16 %v520, %v519
      %v536 = vpack.c.b16 %v522, %v521
      %v537 = vpack.c.b16 %v524, %v523
      %v538 = vpack.c.b16 %v526, %v525
      %v539 = vpack.c.b16 %v528, %v527
      %v540 = vpack.c.b16 %v530, %v529
      %v541 = vpack.c.b16 %v532, %v531
      %v542 = vpack.c.b16 %v534, %v533
      %551 = vmatprep.subr.bf16.mxu0 0
      %552 = vmatpush1.bf16.msra.mxu0 %v542
      %553 = vmatprep.subr.bf16.mxu0 0
      %554 = vmatpush1.bf16.msra.mxu0 %v541
      %555 = vmatprep.subr.bf16.mxu0 0
      %556 = vmatpush1.bf16.msra.mxu0 %v540
      %557 = vmatprep.subr.bf16.mxu0 0
      %558 = vmatpush1.bf16.msra.mxu0 %v539
      %559 = vmatprep.subr.bf16.mxu0 0
      %560 = vmatpush1.bf16.msra.mxu0 %v538
      %561 = vmatprep.subr.bf16.mxu0 0
      %562 = vmatpush1.bf16.msra.mxu0 %v537
      %563 = vmatprep.subr.bf16.mxu0 0
      %564 = vmatpush1.bf16.msra.mxu0 %v536
      %565 = vmatprep.subr.bf16.mxu0 0
      %566 = vmatpush1.bf16.msra.mxu0 %v535
      %567 = vmatprep.subr.bf16.mxu0 0
      %568 = vmatpush2.bf16.msra.mxu0 0
      %569 = vmatprep.subr.bf16.mxu0 0
      %570 = vmatpush2.bf16.msra.mxu0 0
      %571 = vmatprep.subr.bf16.mxu0 0
      %572 = vmatpush2.bf16.msra.mxu0 0
      %573 = vmatprep.subr.bf16.mxu0 0
      %574 = vmatpush2.bf16.msra.mxu0 0
      %575 = vmatprep.subr.bf16.mxu0 0
      %576 = vmatpush2.bf16.msra.mxu0 0
      %577 = vmatprep.subr.bf16.mxu0 0
      %578 = vmatpush2.bf16.msra.mxu0 0
      %579 = vmatprep.subr.bf16.mxu0 0
      %580 = vmatpush2.bf16.msra.mxu0 0
      %581 = vmatprep.subr.bf16.mxu0 0
      %582 = vmatpush2.bf16.msra.mxu0 0
      %583 = vmatprep.mubr.bf16.mxu0 0
      %584 = vmatmul.mubr.bf16.gmra.mxu0 %v476
      %v585 = vpop.f32.mrf.mxu0
      %v586 = vadd.f32 %v501, %v585
      %v587 = vpop.f32.mrf.mxu0
      %v588 = vpop.f32.mrf.mxu0
      %v589 = vadd.f32 %v501, %v588
      %v590 = vpop.f32.mrf.mxu0
      %591 = vmatprep.mubr.bf16.mxu0 0
      %592 = vmatmul.mubr.bf16.gmra.mxu0 %v477
      %v593 = vpop.f32.mrf.mxu0
      %v594 = vadd.f32 %v501, %v593
      %v595 = vpop.f32.mrf.mxu0
      %v596 = vpop.f32.mrf.mxu0
      %v597 = vadd.f32 %v501, %v596
      %v598 = vpop.f32.mrf.mxu0
      %599 = vmatprep.mubr.bf16.mxu0 0
      %600 = vmatmul.mubr.bf16.gmra.mxu0 %v478
      %v601 = vpop.f32.mrf.mxu0
      %v602 = vadd.f32 %v501, %v601
      %v603 = vpop.f32.mrf.mxu0
      %v604 = vpop.f32.mrf.mxu0
      %v605 = vadd.f32 %v501, %v604
      %v606 = vpop.f32.mrf.mxu0
      %607 = vmatprep.mubr.bf16.mxu0 0
      %608 = vmatmul.mubr.bf16.gmra.mxu0 %v479
      %v609 = vpop.f32.mrf.mxu0
      %v610 = vadd.f32 %v501, %v609
      %v611 = vpop.f32.mrf.mxu0
      %v612 = vpop.f32.mrf.mxu0
      %v613 = vadd.f32 %v501, %v612
      %v614 = vpop.f32.mrf.mxu0
      %615 = vdwg.mxu0
      %616 = vmax.xlane.f32.xlu0 %v586
      %v617 = vpop.xlane.xlu0 %616
      %618 = vmax.xlane.f32.xlu0 %v589
      %v619 = vpop.xlane.xlu0 %618
      %620 = vmax.xlane.f32.xlu0 %v594
      %v621 = vpop.xlane.xlu0 %620
      %622 = vmax.xlane.f32.xlu0 %v597
      %v623 = vpop.xlane.xlu0 %622
      %624 = vmax.xlane.f32.xlu0 %v602
      %v625 = vpop.xlane.xlu0 %624
      %626 = vmax.xlane.f32.xlu0 %v605
      %v627 = vpop.xlane.xlu0 %626
      %628 = vmax.xlane.f32.xlu0 %v610
      %v629 = vpop.xlane.xlu0 %628
      %630 = vmax.xlane.f32.xlu0 %v613
      %v631 = vpop.xlane.xlu0 %630
      %v632 = vsub.f32 %v586, %v617
      %v633 = vsub.f32 %v589, %v619
      %v634 = vsub.f32 %v594, %v621
      %v635 = vsub.f32 %v597, %v623
      %v636 = vsub.f32 %v602, %v625
      %v637 = vsub.f32 %v605, %v627
      %v638 = vsub.f32 %v610, %v629
      %v639 = vsub.f32 %v613, %v631
      %v640 = vmul.f32 %v632, 1.442695
      %v641 = vpow.pop %v640
      %v642 = vmul.f32 %v633, 1.442695
      %v643 = vpow.pop %v642
      %v644 = vmul.f32 %v634, 1.442695
      %v645 = vpow.pop %v644
      %v646 = vmul.f32 %v635, 1.442695
      %v647 = vpow.pop %v646
      %v648 = vmul.f32 %v636, 1.442695
      %v649 = vpow.pop %v648
      %v650 = vmul.f32 %v637, 1.442695
      %v651 = vpow.pop %v650
      %v652 = vmul.f32 %v638, 1.442695
      %v653 = vpow.pop %v652
      %v654 = vmul.f32 %v639, 1.442695
      %v655 = vpow.pop %v654
      %656 = vadd.xlane.f32.xlu0 %v641
      %v657 = vpop.xlane.xlu0 %656
      %658 = vadd.xlane.f32.xlu0 %v643
      %v659 = vpop.xlane.xlu0 %658
      %660 = vadd.xlane.f32.xlu0 %v645
      %v661 = vpop.xlane.xlu0 %660
      %662 = vadd.xlane.f32.xlu0 %v647
      %v663 = vpop.xlane.xlu0 %662
      %664 = vadd.xlane.f32.xlu0 %v649
      %v665 = vpop.xlane.xlu0 %664
      %666 = vadd.xlane.f32.xlu0 %v651
      %v667 = vpop.xlane.xlu0 %666
      %668 = vadd.xlane.f32.xlu0 %v653
      %v669 = vpop.xlane.xlu0 %668
      %670 = vadd.xlane.f32.xlu0 %v655
      %v671 = vpop.xlane.xlu0 %670
      %v672 = vrcp.pop %v657
      %v673 = vrcp.pop %v659
      %v674 = vrcp.pop %v661
      %v675 = vrcp.pop %v663
      %v676 = vrcp.pop %v665
      %v677 = vrcp.pop %v667
      %v678 = vrcp.pop %v669
      %v679 = vrcp.pop %v671
      %v680 = vmul.f32 %v641, %v672
      %v681 = vmul.f32 %v643, %v673
      %v682 = vmul.f32 %v645, %v674
      %v683 = vmul.f32 %v647, %v675
      %v684 = vmul.f32 %v649, %v676
      %v685 = vmul.f32 %v651, %v677
      %v686 = vmul.f32 %v653, %v678
      %v687 = vmul.f32 %v655, %v679
      %688 = vst [vmem:[%s302] sm:$0xff] %v680
      %689 = vst [vmem:[%s302 + $0x8] sm:$0xff] %v681
      %690 = vst [vmem:[%s302 + $0x10] sm:$0xff] %v682
      %691 = vst [vmem:[%s302 + $0x18] sm:$0xff] %v683
      %692 = vst [vmem:[%s302 + $0x20] sm:$0xff] %v684
      %693 = vst [vmem:[%s302 + $0x28] sm:$0xff] %v685
      %694 = vst [vmem:[%s302 + $0x30] sm:$0xff] %v686
      %695 = vst [vmem:[%s302 + $0x38] sm:$0xff] %v687
      %v696 = vld [vmem:[#allocation2] sm:$0xff]
      %v697 = vld [vmem:[#allocation2 + $0x8] sm:$0xff]
      %v698 = vld [vmem:[#allocation2 + $0x10] sm:$0xff]
      %v699 = vld [vmem:[#allocation2 + $0x18] sm:$0xff]
      %v700 = vld [vmem:[#allocation2 + $0x20] sm:$0xff]
      %v701 = vld [vmem:[#allocation2 + $0x28] sm:$0xff]
      %v702 = vld [vmem:[#allocation2 + $0x30] sm:$0xff]
      %v703 = vld [vmem:[#allocation2 + $0x38] sm:$0xff]
      %v704 = vld [vmem:[#allocation2 + $0x40] sm:$0xff]
      %v705 = vld [vmem:[#allocation2 + $0x48] sm:$0xff]
      %v706 = vld [vmem:[#allocation2 + $0x50] sm:$0xff]
      %v707 = vld [vmem:[#allocation2 + $0x58] sm:$0xff]
      %v708 = vld [vmem:[#allocation2 + $0x60] sm:$0xff]
      %v709 = vld [vmem:[#allocation2 + $0x68] sm:$0xff]
      %v710 = vld [vmem:[#allocation2 + $0x70] sm:$0xff]
      %v711 = vld [vmem:[#allocation2 + $0x78] sm:$0xff]
      %v712 = vpack.c.bf16 %v681, %v680
      %v713 = vpack.c.bf16 %v683, %v682
      %v714 = vpack.c.bf16 %v685, %v684
      %v715 = vpack.c.bf16 %v687, %v686
      %v716 = vpack.c.bf16 %v444, %v440
      %v717 = vpack.c.bf16 %v454, %v450
      %v718 = vpack.c.bf16 %v464, %v460
      %v719 = vpack.c.bf16 %v474, %v470
      %720 = vxpose.xlu0.c.b16.start [1/8] %v712, 128
      %721 = vxpose.xlu0.c.b16.cont [2/8] %v713, 128
      %722 = vxpose.xlu0.c.b16.cont [3/8] %v714, 128
      %723 = vxpose.xlu0.c.b16.cont [4/8] %v715, 128
      %724 = vxpose.xlu0.c.b16.cont [5/8] 0, 128
      %725 = vxpose.xlu0.c.b16.cont [6/8] 0, 128
      %726 = vxpose.xlu0.c.b16.cont [7/8] 0, 128
      %727 = vxpose.xlu0.c.b16.end [8/8] 0, 128
      %v728 = vpop.trf.xlu0
      %v729 = vpop.trf.xlu0
      %v730 = vpop.trf.xlu0
      %v731 = vpop.trf.xlu0
      %v732 = vpop.trf.xlu0
      %v733 = vpop.trf.xlu0
      %v734 = vpop.trf.xlu0
      %v735 = vpop.trf.xlu0
      %vm736 = vcmask 523264
      %v738 = vsel %vm736, %v728, 0
      %v741 = vsel %vm736, %v729, 0
      %v744 = vsel %vm736, %v730, 0
      %v747 = vsel %vm736, %v731, 0
      %v750 = vsel %vm736, %v732, 0
      %v753 = vsel %vm736, %v733, 0
      %v756 = vsel %vm736, %v734, 0
      %v759 = vsel %vm736, %v735, 0
      %761 = vmatprep.subr.bf16.mxu0 0
      %762 = vmatpush1.bf16.msra.mxu0 0
      %763 = vmatprep.subr.bf16.mxu0 0
      %764 = vmatpush1.bf16.msra.mxu0 0
      %765 = vmatprep.subr.bf16.mxu0 0
      %766 = vmatpush1.bf16.msra.mxu0 0
      %767 = vmatprep.subr.bf16.mxu0 0
      %768 = vmatpush1.bf16.msra.mxu0 0
      %769 = vmatprep.subr.bf16.mxu0 0
      %770 = vmatpush1.bf16.msra.mxu0 %v719
      %771 = vmatprep.subr.bf16.mxu0 0
      %772 = vmatpush1.bf16.msra.mxu0 %v718
      %773 = vmatprep.subr.bf16.mxu0 0
      %774 = vmatpush1.bf16.msra.mxu0 %v717
      %775 = vmatprep.subr.bf16.mxu0 0
      %776 = vmatpush1.bf16.msra.mxu0 %v716
      %777 = vmatprep.subr.bf16.mxu0 0
      %778 = vmatpush2.bf16.msra.mxu0 0
      %779 = vmatprep.subr.bf16.mxu0 0
      %780 = vmatpush2.bf16.msra.mxu0 0
      %781 = vmatprep.subr.bf16.mxu0 0
      %782 = vmatpush2.bf16.msra.mxu0 0
      %783 = vmatprep.subr.bf16.mxu0 0
      %784 = vmatpush2.bf16.msra.mxu0 0
      %785 = vmatprep.subr.bf16.mxu0 0
      %786 = vmatpush2.bf16.msra.mxu0 0
      %787 = vmatprep.subr.bf16.mxu0 0
      %788 = vmatpush2.bf16.msra.mxu0 0
      %789 = vmatprep.subr.bf16.mxu0 0
      %790 = vmatpush2.bf16.msra.mxu0 0
      %791 = vmatprep.subr.bf16.mxu0 0
      %792 = vmatpush2.bf16.msra.mxu0 0
      %793 = vmatprep.mubr.bf16.mxu0 0
      %794 = vmatmul.mubr.bf16.gmra.mxu0 %v738
      %v795 = vpop.f32.mrf.mxu0
      %v796 = vadd.f32 0.0, %v795
      %v797 = vpop.f32.mrf.mxu0
      %v798 = vpop.f32.mrf.mxu0
      %v799 = vadd.f32 0.0, %v798
      %v800 = vpop.f32.mrf.mxu0
      %801 = vmatprep.mubr.bf16.mxu0 0
      %802 = vmatmul.mubr.bf16.gmra.mxu0 %v741
      %v803 = vpop.f32.mrf.mxu0
      %v804 = vadd.f32 0.0, %v803
      %v805 = vpop.f32.mrf.mxu0
      %v806 = vpop.f32.mrf.mxu0
      %v807 = vadd.f32 0.0, %v806
      %v808 = vpop.f32.mrf.mxu0
      %809 = vmatprep.mubr.bf16.mxu0 0
      %810 = vmatmul.mubr.bf16.gmra.mxu0 %v744
      %v811 = vpop.f32.mrf.mxu0
      %v812 = vadd.f32 0.0, %v811
      %v813 = vpop.f32.mrf.mxu0
      %v814 = vpop.f32.mrf.mxu0
      %v815 = vadd.f32 0.0, %v814
      %v816 = vpop.f32.mrf.mxu0
      %817 = vmatprep.mubr.bf16.mxu0 0
      %818 = vmatmul.mubr.bf16.gmra.mxu0 %v747
      %v819 = vpop.f32.mrf.mxu0
      %v820 = vadd.f32 0.0, %v819
      %v821 = vpop.f32.mrf.mxu0
      %v822 = vpop.f32.mrf.mxu0
      %v823 = vadd.f32 0.0, %v822
      %v824 = vpop.f32.mrf.mxu0
      %825 = vmatprep.mubr.bf16.mxu0 0
      %826 = vmatmul.mubr.bf16.gmra.mxu0 %v750
      %v827 = vpop.f32.mrf.mxu0
      %v828 = vadd.f32 0.0, %v827
      %v829 = vpop.f32.mrf.mxu0
      %v830 = vpop.f32.mrf.mxu0
      %v831 = vadd.f32 0.0, %v830
      %v832 = vpop.f32.mrf.mxu0
      %833 = vmatprep.mubr.bf16.mxu0 0
      %834 = vmatmul.mubr.bf16.gmra.mxu0 %v753
      %v835 = vpop.f32.mrf.mxu0
      %v836 = vadd.f32 0.0, %v835
      %v837 = vpop.f32.mrf.mxu0
      %v838 = vpop.f32.mrf.mxu0
      %v839 = vadd.f32 0.0, %v838
      %v840 = vpop.f32.mrf.mxu0
      %841 = vmatprep.mubr.bf16.mxu0 0
      %842 = vmatmul.mubr.bf16.gmra.mxu0 %v756
      %v843 = vpop.f32.mrf.mxu0
      %v844 = vadd.f32 0.0, %v843
      %v845 = vpop.f32.mrf.mxu0
      %v846 = vpop.f32.mrf.mxu0
      %v847 = vadd.f32 0.0, %v846
      %v848 = vpop.f32.mrf.mxu0
      %849 = vmatprep.mubr.bf16.mxu0 0
      %850 = vmatmul.mubr.bf16.gmra.mxu0 %v759
      %v851 = vpop.f32.mrf.mxu0
      %v852 = vadd.f32 0.0, %v851
      %v853 = vpop.f32.mrf.mxu0
      %v854 = vpop.f32.mrf.mxu0
      %v855 = vadd.f32 0.0, %v854
      %v856 = vpop.f32.mrf.mxu0
      %857 = vdwg.mxu0
      %v858 = vadd.f32 %v696, %v796
      %v859 = vadd.f32 %v697, %v799
      %v860 = vadd.f32 %v698, %v804
      %v861 = vadd.f32 %v699, %v807
      %v862 = vadd.f32 %v700, %v812
      %v863 = vadd.f32 %v701, %v815
      %v864 = vadd.f32 %v702, %v820
      %v865 = vadd.f32 %v703, %v823
      %v866 = vadd.f32 %v704, %v828
      %v867 = vadd.f32 %v705, %v831
      %v868 = vadd.f32 %v706, %v836
      %v869 = vadd.f32 %v707, %v839
      %v870 = vadd.f32 %v708, %v844
      %v871 = vadd.f32 %v709, %v847
      %v872 = vadd.f32 %v710, %v852
      %v873 = vadd.f32 %v711, %v855
      %874 = vst [vmem:[#allocation2] sm:$0xff] %v858
      %875 = vst [vmem:[#allocation2 + $0x8] sm:$0xff] %v859
      %876 = vst [vmem:[#allocation2 + $0x10] sm:$0xff] %v860
      %877 = vst [vmem:[#allocation2 + $0x18] sm:$0xff] %v861
      %878 = vst [vmem:[#allocation2 + $0x20] sm:$0xff] %v862
      %879 = vst [vmem:[#allocation2 + $0x28] sm:$0xff] %v863
      %880 = vst [vmem:[#allocation2 + $0x30] sm:$0xff] %v864
      %881 = vst [vmem:[#allocation2 + $0x38] sm:$0xff] %v865
      %882 = vst [vmem:[#allocation2 + $0x40] sm:$0xff] %v866
      %883 = vst [vmem:[#allocation2 + $0x48] sm:$0xff] %v867
      %884 = vst [vmem:[#allocation2 + $0x50] sm:$0xff] %v868
      %885 = vst [vmem:[#allocation2 + $0x58] sm:$0xff] %v869
      %886 = vst [vmem:[#allocation2 + $0x60] sm:$0xff] %v870
      %887 = vst [vmem:[#allocation2 + $0x68] sm:$0xff] %v871
      %888 = vst [vmem:[#allocation2 + $0x70] sm:$0xff] %v872
      %889 = vst [vmem:[#allocation2 + $0x78] sm:$0xff] %v873
      %v890 = vld [vmem:[#allocation3] sm:$0x1]
      %v891 = vadd.f32 %v680, %v681
      %v892 = vadd.f32 %v891, %v682
      %v893 = vadd.f32 %v892, %v683
      %v894 = vadd.f32 %v893, %v684
      %v895 = vadd.f32 %v894, %v685
      %v896 = vadd.f32 %v895, %v686
      %v897 = vadd.f32 %v896, %v687
      %v898 = vrot.slane %v897, 4
      %v899 = vadd.f32 %v897, %v898
      %v900 = vrot.slane %v899, 2
      %v901 = vadd.f32 %v899, %v900
      %v902 = vrot.slane %v901, 1
      %v903 = vadd.f32 %v901, %v902
      %v904 = vadd.f32 %v890, %v903
      %905 = vst [vmem:[#allocation3] sm:$0x1] %v904
      %p906 = scmp.eq.s32.totalorder %s23, 1
      // Predicated region
      $region45: #{_lambda_.1} parent=39 // pred_check
        %p907 = pneg %p906
      $region46: #{_lambda_.1} parent=39 // pred_check_branch
        %909 = sbr.rel (%p907) target = $region48
      $region47: #{_lambda_.1} parent=39 // pred_region
        %v910 = vld [vmem:[#allocation3] sm:$0x1]
        %v911 = vlaneseq
        %v912 = vshrl.u32 %v911, 7
        %v913 = vsub.s32 0, %v912
        %v914 = vrot.slane %v910, %v913
        %916 = vbcast.lane.b32.xlu0 %v914, 256
        %v917 = vpop.permute.xlu0 %916
        %s919 = sor.u32 256, 8
        %920 = vbcast.lane.b32.xlu0 %v914, %s919
        %v921 = vpop.permute.xlu0 %920
        %s923 = sor.u32 256, 16
        %924 = vbcast.lane.b32.xlu0 %v914, %s923
        %v925 = vpop.permute.xlu0 %924
        %s927 = sor.u32 256, 24
        %928 = vbcast.lane.b32.xlu0 %v914, %s927
        %v929 = vpop.permute.xlu0 %928
        %s931 = sor.u32 256, 32
        %932 = vbcast.lane.b32.xlu0 %v914, %s931
        %v933 = vpop.permute.xlu0 %932
        %s935 = sor.u32 256, 40
        %936 = vbcast.lane.b32.xlu0 %v914, %s935
        %v937 = vpop.permute.xlu0 %936
        %s939 = sor.u32 256, 48
        %940 = vbcast.lane.b32.xlu0 %v914, %s939
        %v941 = vpop.permute.xlu0 %940
        %s943 = sor.u32 256, 56
        %944 = vbcast.lane.b32.xlu0 %v914, %s943
        %v945 = vpop.permute.xlu0 %944
        %s947 = sor.u32 256, 64
        %948 = vbcast.lane.b32.xlu0 %v914, %s947
        %v949 = vpop.permute.xlu0 %948
        %s951 = sor.u32 256, 72
        %952 = vbcast.lane.b32.xlu0 %v914, %s951
        %v953 = vpop.permute.xlu0 %952
        %s955 = sor.u32 256, 80
        %956 = vbcast.lane.b32.xlu0 %v914, %s955
        %v957 = vpop.permute.xlu0 %956
        %s959 = sor.u32 256, 88
        %960 = vbcast.lane.b32.xlu0 %v914, %s959
        %v961 = vpop.permute.xlu0 %960
        %s963 = sor.u32 256, 96
        %964 = vbcast.lane.b32.xlu0 %v914, %s963
        %v965 = vpop.permute.xlu0 %964
        %s967 = sor.u32 256, 104
        %968 = vbcast.lane.b32.xlu0 %v914, %s967
        %v969 = vpop.permute.xlu0 %968
        %s971 = sor.u32 256, 112
        %972 = vbcast.lane.b32.xlu0 %v914, %s971
        %v973 = vpop.permute.xlu0 %972
        %s975 = sor.u32 256, 120
        %976 = vbcast.lane.b32.xlu0 %v914, %s975
        %v977 = vpop.permute.xlu0 %976
        %v978 = vadd.f32 %v917, 1e-05
        %v979 = vadd.f32 %v921, 1e-05
        %v980 = vadd.f32 %v925, 1e-05
        %v981 = vadd.f32 %v929, 1e-05
        %v982 = vadd.f32 %v933, 1e-05
        %v983 = vadd.f32 %v937, 1e-05
        %v984 = vadd.f32 %v941, 1e-05
        %v985 = vadd.f32 %v945, 1e-05
        %v986 = vadd.f32 %v949, 1e-05
        %v987 = vadd.f32 %v953, 1e-05
        %v988 = vadd.f32 %v957, 1e-05
        %v989 = vadd.f32 %v961, 1e-05
        %v990 = vadd.f32 %v965, 1e-05
        %v991 = vadd.f32 %v969, 1e-05
        %v992 = vadd.f32 %v973, 1e-05
        %v993 = vadd.f32 %v977, 1e-05
        %v994 = vrcp.pop %v978
        %v995 = vrcp.pop %v979
        %v996 = vrcp.pop %v980
        %v997 = vrcp.pop %v981
        %v998 = vrcp.pop %v982
        %v999 = vrcp.pop %v983
        %v1000 = vrcp.pop %v984
        %v1001 = vrcp.pop %v985
        %v1002 = vrcp.pop %v986
        %v1003 = vrcp.pop %v987
        %v1004 = vrcp.pop %v988
        %v1005 = vrcp.pop %v989
        %v1006 = vrcp.pop %v990
        %v1007 = vrcp.pop %v991
        %v1008 = vrcp.pop %v992
        %v1009 = vrcp.pop %v993
        %v1010 = vld [vmem:[#allocation2] sm:$0xff]
        %v1011 = vld [vmem:[#allocation2 + $0x8] sm:$0xff]
        %v1012 = vld [vmem:[#allocation2 + $0x10] sm:$0xff]
        %v1013 = vld [vmem:[#allocation2 + $0x18] sm:$0xff]
        %v1014 = vld [vmem:[#allocation2 + $0x20] sm:$0xff]
        %v1015 = vld [vmem:[#allocation2 + $0x28] sm:$0xff]
        %v1016 = vld [vmem:[#allocation2 + $0x30] sm:$0xff]
        %v1017 = vld [vmem:[#allocation2 + $0x38] sm:$0xff]
        %v1018 = vld [vmem:[#allocation2 + $0x40] sm:$0xff]
        %v1019 = vld [vmem:[#allocation2 + $0x48] sm:$0xff]
        %v1020 = vld [vmem:[#allocation2 + $0x50] sm:$0xff]
        %v1021 = vld [vmem:[#allocation2 + $0x58] sm:$0xff]
        %v1022 = vld [vmem:[#allocation2 + $0x60] sm:$0xff]
        %v1023 = vld [vmem:[#allocation2 + $0x68] sm:$0xff]
        %v1024 = vld [vmem:[#allocation2 + $0x70] sm:$0xff]
        %v1025 = vld [vmem:[#allocation2 + $0x78] sm:$0xff]
        %v1026 = vmul.f32 %v1010, %v994
        %v1027 = vmul.f32 %v1011, %v995
        %v1028 = vmul.f32 %v1012, %v996
        %v1029 = vmul.f32 %v1013, %v997
        %v1030 = vmul.f32 %v1014, %v998
        %v1031 = vmul.f32 %v1015, %v999
        %v1032 = vmul.f32 %v1016, %v1000
        %v1033 = vmul.f32 %v1017, %v1001
        %v1034 = vmul.f32 %v1018, %v1002
        %v1035 = vmul.f32 %v1019, %v1003
        %v1036 = vmul.f32 %v1020, %v1004
        %v1037 = vmul.f32 %v1021, %v1005
        %v1038 = vmul.f32 %v1022, %v1006
        %v1039 = vmul.f32 %v1023, %v1007
        %v1040 = vmul.f32 %v1024, %v1008
        %v1041 = vmul.f32 %v1025, %v1009
        %1042 = vst [vmem:[%s293] sm:$0xff] %v1026
        %1043 = vst [vmem:[%s293 + $0x8] sm:$0xff] %v1027
        %1044 = vst [vmem:[%s293 + $0x10] sm:$0xff] %v1028
        %1045 = vst [vmem:[%s293 + $0x18] sm:$0xff] %v1029
        %1046 = vst [vmem:[%s293 + $0x20] sm:$0xff] %v1030
        %1047 = vst [vmem:[%s293 + $0x28] sm:$0xff] %v1031
        %1048 = vst [vmem:[%s293 + $0x30] sm:$0xff] %v1032
        %1049 = vst [vmem:[%s293 + $0x38] sm:$0xff] %v1033
        %1050 = vst [vmem:[%s293 + $0x40] sm:$0xff] %v1034
        %1051 = vst [vmem:[%s293 + $0x48] sm:$0xff] %v1035
        %1052 = vst [vmem:[%s293 + $0x50] sm:$0xff] %v1036
        %1053 = vst [vmem:[%s293 + $0x58] sm:$0xff] %v1037
        %1054 = vst [vmem:[%s293 + $0x60] sm:$0xff] %v1038
        %1055 = vst [vmem:[%s293 + $0x68] sm:$0xff] %v1039
        %1056 = vst [vmem:[%s293 + $0x70] sm:$0xff] %v1040
        %1057 = vst [vmem:[%s293 + $0x78] sm:$0xff] %v1041
      $region48: #{_lambda_.1} parent=39 // pred_fallthru
        _
      %p1058 = scmp.lt.s32.totalorder %s22, 1
      %s1059 = scalar_select %p1058, %s22, 1
      %s1060 = smul.addr %s1059, 16
      %s1061 = smul.addr %s1060, 8
      %s1062 = scalar_lea.vmem %s5, %s1061
      %s1063 = smul.u32 8, %s23
      %p1064 = scmp.lt.s32.totalorder %s22, 1
      %s1065 = scalar_select %p1064, %s22, 1
      %p1066 = scmp.lt.s32.totalorder %s1063, 15
      %s1067 = scalar_select %p1066, %s1063, 15
      %s1068 = smul.addr %s1065, 16
      %s1069 = sadd.s32 %s1067, %s1068
      %s1070 = smul.addr %s1069, 8
      %s1071 = scalar_lea.vmem %s6, %s1070
      // Predicated region
      $region49: #{_lambda_.1} parent=39 // pred_check
        %p1072 = pneg %p160
      $region50: #{_lambda_.1} parent=39 // pred_check_branch
        %1074 = sbr.rel (%p1072) target = $region52
      $region51: #{_lambda_.1} parent=39 // pred_region
        _
      $region52: #{_lambda_.1} parent=39 // pred_fallthru
        _
      // Predicated region
      $region53: #{_lambda_.1} parent=39 // pred_check
        %p1075 = pneg %p188
      $region54: #{_lambda_.1} parent=39 // pred_check_branch
        %1077 = sbr.rel (%p1075) target = $region56
      $region55: #{_lambda_.1} parent=39 // pred_region
        %s1078 = smul.u32 8, %s23
      $region56: #{_lambda_.1} parent=39 // pred_fallthru
        _
    $region40: #{_lambda_.1} parent=5 // pred_fallthru
      _
    %p1079 = scmp.le.s32.totalorder 2, %s13
    // Predicated region
    $region57: #{_lambda_.1} parent=5 // pred_check
      %p1080 = pneg %p1079
    $region58: #{_lambda_.1} parent=5 // pred_check_branch
      %1082 = sbr.rel (%p1080) target = $region60
    $region59: #{_lambda_.1} parent=5 // pred_region
      %s1083 = ssub.s32 %s13, 2
      // Predicated region
      $region61: #{_lambda_.1} parent=59 // pred_check
        %p1084 = pneg %p166
      $region62: #{_lambda_.1} parent=59 // pred_check_branch
        %1086 = sbr.rel (%p1084) target = $region64
      $region63: #{_lambda_.1} parent=59 // pred_region
        %p1087 = scmp.lt.s32.totalorder %s24, 1
        %s1088 = scalar_select %p1087, %s24, 1
        %s1089 = smul.addr %s1088, 16
        %s1090 = smul.addr %s1089, 8
        %s1091 = scalar_lea.vmem %s5, %s1090
      $region64: #{_lambda_.1} parent=59 // pred_fallthru
        _
      // Predicated region
      $region65: #{_lambda_.1} parent=59 // pred_check
        %p1092 = pneg %p194
      $region66: #{_lambda_.1} parent=59 // pred_check_branch
        %1094 = sbr.rel (%p1092) target = $region68
      $region67: #{_lambda_.1} parent=59 // pred_region
        %s1095 = smul.u32 8, %s25
        %p1096 = scmp.lt.s32.totalorder %s24, 1
        %s1097 = scalar_select %p1096, %s24, 1
        %p1098 = scmp.lt.s32.totalorder %s1095, 15
        %s1099 = scalar_select %p1098, %s1095, 15
        %s1100 = smul.addr %s1097, 16
        %s1101 = sadd.s32 %s1099, %s1100
        %s1102 = smul.addr %s1101, 8
        %s1103 = scalar_lea.vmem %s6, %s1102
      $region68: #{_lambda_.1} parent=59 // pred_fallthru
        _
    $region60: #{_lambda_.1} parent=5 // pred_fallthru
      _
  $region6: #{_lambda_.1} parent=0 // loop_footer
    %s17 = sadd.s32 1, %s13
  $region7: #{_lambda_.1} parent=0 // loop_footer_branch
    %12 = sbr.rel target = $region3
  $region8: #{_lambda_.1} parent=0 // loop_exit
    _

</llo_original>
